<compile_context>
chip_gen: v5e
topology: v5e:2x2
jax: 0.10.0
libtpu: 0.0.40
codegen_flags: <defaults>
</compile_context>

<pallas_src>
import jax
import jax.numpy as jnp
import numpy as np
from jax.experimental import pallas as pl
from jax.experimental.pallas import tpu as pltpu


def unet_kernel(p_ref, w1_ref, b1_ref, w2_ref, b2_ref, o_ref):
    p = p_ref[0]                                        # (4, K, tg) bf16
    w1t = w1_ref[...]                                   # (64, K)    bf16
    # Conv3x3 for each of the 4 pool sub-pixels: 4 small MXU matmuls, pool windows on lanes.
    cs = [jnp.dot(w1t, p[s], preferred_element_type=jnp.float32) for s in range(4)]
    # 2x2 MaxPool == elementwise max over the 4 sub-pixel conv results.
    pooled = jnp.maximum(jnp.maximum(cs[0], cs[1]), jnp.maximum(cs[2], cs[3]))
    # Bias + ReLU hoisted past the max (exact: x -> relu(x + b) is monotone).
    pooled = jnp.maximum(pooled + b1_ref[...], 0.0)     # (64, tg) f32
    # ConvTranspose2d(64->Cout, kernel=2, stride=2): no window overlap -> (QP x 64) GEMM,
    # bf16 operands with f32 accumulation; output stays lane-dense (G on lanes).
    dec = jnp.dot(w2_ref[...], pooled.astype(jnp.bfloat16),
                  preferred_element_type=jnp.float32) + b2_ref[...]   # (QP, tg) f32
    o_ref[0] = dec[:o_ref.shape[1]].astype(o_ref.dtype)


def unet_forward(x, w1, b1, wt, bt, *, max_tg=2048):
    """x: (B, Cin, H, W) NCHW. Returns (B, Cout, H, W) NCHW (PyTorch semantics). Needs even H, W."""
    B, Cin, H, W = x.shape
    assert H % 2 == 0 and W % 2 == 0, "MaxPool2d(2) + ConvTranspose2d(2,2) round-trip assumes even H, W"
    C1 = w1.shape[0]                    # 64 encoder channels
    Cout = wt.shape[1]
    H2, W2 = H // 2, W // 2
    G = H2 * W2
    K = 9 * Cin
    QP = ((4 * Cout + 7) // 8) * 8      # decoder GEMM rows padded to a sublane multiple

    # G-tile (lane dim): full G when it fits, else a multiple of 128 (ragged tail handled by
    # Pallas block padding — garbage lanes never cross columns and OOB writes are dropped).
    if G <= max_tg:
        tg, nG = G, 1
    else:
        tg, nG = max_tg, pl.cdiv(G, max_tg)

    # ---- glue: sub-pixel-major, transposed im2col (no zero padding anywhere) -------------
    # TODO(synk): move this tap construction into the kernel (pl.ANY + manual DMA) for large
    # images to avoid the 9x-expanded patches array in HBM.
    xp = jnp.pad(x, ((0, 0), (0, 0), (1, 1), (1, 1)))
    taps = [xp[:, :, dy:dy + H, dx:dx + W] for dy in range(3) for dx in range(3)]
    pt = jnp.stack(taps, axis=2)                               # (B, Cin, 9, H, W)
    pt = pt.reshape(B, Cin, 9, H2, 2, W2, 2)                   # (B, ci, t, h2, hh, w2, ww)
    pt = pt.transpose(0, 4, 6, 2, 1, 3, 5)                     # (B, hh, ww, t, ci, h2, w2)
    patches = pt.reshape(B, 4, K, G).astype(jnp.bfloat16)      # sub = 2*hh+ww, k = t*Cin+ci

    # ---- glue: weights as transposed, lane-dense matmul operands --------------------------
    w1t = w1.transpose(0, 2, 3, 1).reshape(C1, K).astype(jnp.bfloat16)   # k = (dy*3+dx)*Cin+ci
    b1m = b1.reshape(C1, 1).astype(jnp.float32)
    w2m = wt.transpose(2, 3, 1, 0).reshape(4 * Cout, C1)                 # q = (r*2+s)*Cout+co
    w2t = jnp.pad(w2m, ((0, QP - 4 * Cout), (0, 0))).astype(jnp.bfloat16)
    b2m = jnp.pad(jnp.tile(bt, 4).reshape(4 * Cout, 1),
                  ((0, QP - 4 * Cout), (0, 0))).astype(jnp.float32)

    out = pl.pallas_call(
        unet_kernel,
        out_shape=jax.ShapeDtypeStruct((B, 4 * Cout, G), jnp.float32),
        grid_spec=pltpu.PrefetchScalarGridSpec(
            num_scalar_prefetch=0,
            grid=(B, nG),
            in_specs=[
                pl.BlockSpec((1, 4, K, tg), lambda b, j: (b, 0, 0, j)),
                pl.BlockSpec((C1, K), lambda b, j: (0, 0)),
                pl.BlockSpec((C1, 1), lambda b, j: (0, 0)),
                pl.BlockSpec((QP, C1), lambda b, j: (0, 0)),
                pl.BlockSpec((QP, 1), lambda b, j: (0, 0)),
            ],
            out_specs=pl.BlockSpec((1, 4 * Cout, tg), lambda b, j: (b, 0, j)),
        ),
        compiler_params=pltpu.CompilerParams(
            # Both axes independent -> megacore / v7x 2-TC split even at B=1.
            dimension_semantics=("parallel", "parallel"),
            vmem_limit_bytes=48 * 1024 * 1024,   # tiles are a few MiB; safe on v5e/v6e/v7x
        ),
    )(patches, w1t, b1m, w2t, b2m)

    # ---- glue: scatter deconv sub-pixels back to NCHW (no padded lanes to drop) -----------
    y = out.reshape(B, 2, 2, Cout, H2, W2)                     # (b, r, s, co, h2, w2)
    y = y.transpose(0, 3, 4, 1, 5, 2).reshape(B, Cout, H, W)
    return y


def unet_reference(x, w1, b1, wt, bt):
    """Pure-JAX reference mirroring the PyTorch forward (sanity check)."""
    hi = jax.lax.Precision.HIGHEST
    y = jax.lax.conv_general_dilated(
        x, w1, (1, 1), ((1, 1), (1, 1)),
        dimension_numbers=("NCHW", "OIHW", "NCHW"), precision=hi)
    y = y + b1[None, :, None, None]
    y = jnp.maximum(y, 0.0)
    B, C, H, W = y.shape
    y = y.reshape(B, C, H // 2, 2, W // 2, 2).max(axis=(3, 5))
    t = jnp.einsum("bchw,cokl->bohkwl", y, wt, precision=hi)
    Cout = wt.shape[1]
    t = t.reshape(B, Cout, H, W) + bt[None, :, None, None]
    return t


if __name__ == "__main__":
    key = jax.random.PRNGKey(0)
    kx, kw1, kb1, kw2, kb2 = jax.random.split(key, 5)

    B, Cin, H, W = 2, 1, 16, 16
    Cout = 1
    x = jax.random.normal(kx, (B, Cin, H, W), dtype=jnp.float32)

    # Deterministic PyTorch-style uniform(-1/sqrt(fan_in), +1/sqrt(fan_in)) init.
    bnd1 = 1.0 / np.sqrt(Cin * 3 * 3)
    w1 = jax.random.uniform(kw1, (64, Cin, 3, 3), jnp.float32, -bnd1, bnd1)
    b1 = jax.random.uniform(kb1, (64,), jnp.float32, -bnd1, bnd1)
    bnd2 = 1.0 / np.sqrt(Cout * 2 * 2)
    wt = jax.random.uniform(kw2, (64, Cout, 2, 2), jnp.float32, -bnd2, bnd2)
    bt = jax.random.uniform(kb2, (Cout,), jnp.float32, -bnd2, bnd2)

    y = jax.block_until_ready(unet_forward(x, w1, b1, wt, bt))
    y_ref = jax.block_until_ready(unet_reference(x, w1, b1, wt, bt))

    assert y.shape == (B, Cout, H, W), y.shape
    # Tolerance accounts for bf16 quantization of both GEMMs' operands (f32 accumulation).
    np.testing.assert_allclose(np.asarray(y), np.asarray(y_ref), rtol=2e-2, atol=5e-2)
    print("KERNEL_OK")
</pallas_src>

<mosaic_0001>
module attributes {stable_mosaic.version = 11 : i64} {
  func.func @unet_kernel(%arg0: i32, %arg1: i32, %arg2: memref<1x4x9x64xbf16, #tpu.memory_space<vmem>>, %arg3: memref<64x9xbf16, #tpu.memory_space<vmem>>, %arg4: memref<64x1xf32, #tpu.memory_space<vmem>>, %arg5: memref<8x64xbf16, #tpu.memory_space<vmem>>, %arg6: memref<8x1xf32, #tpu.memory_space<vmem>>, %arg7: memref<1x4x64xf32, #tpu.memory_space<vmem>>) attributes {dimension_semantics = [#tpu.dimension_semantics<parallel>, #tpu.dimension_semantics<parallel>], iteration_bounds = array<i64: 2, 1>, scalar_prefetch = 0 : i64, scratch_operands = 0 : i64, tpu.core_type = #tpu.core_type<tc>, window_params = [{transform_indices = @transform_0, window_bounds = array<i64: 1, 4, 9, 64>}, {pipeline_mode = #tpu.pipeline_mode<synchronous>, transform_indices = @transform_1, window_bounds = array<i64: 64, 9>}, {pipeline_mode = #tpu.pipeline_mode<synchronous>, transform_indices = @transform_2, window_bounds = array<i64: 64, 1>}, {pipeline_mode = #tpu.pipeline_mode<synchronous>, transform_indices = @transform_3, window_bounds = array<i64: 8, 64>}, {pipeline_mode = #tpu.pipeline_mode<synchronous>, transform_indices = @transform_4, window_bounds = array<i64: 8, 1>}, {transform_indices = @transform_5, window_bounds = array<i64: 1, 4, 64>}]} {
    %c0 = arith.constant 0 : index
    %c0_0 = arith.constant 0 : index
    %c0_1 = arith.constant 0 : index
    %c0_2 = arith.constant 0 : index
    %0 = vector.load %arg2[%c0, %c0_0, %c0_1, %c0_2] : memref<1x4x9x64xbf16, #tpu.memory_space<vmem>>, vector<1x4x9x64xbf16>
    %1 = vector.shape_cast %0 : vector<1x4x9x64xbf16> to vector<4x9x64xbf16>
    %c0_3 = arith.constant 0 : index
    %c0_4 = arith.constant 0 : index
    %2 = vector.load %arg3[%c0_3, %c0_4] : memref<64x9xbf16, #tpu.memory_space<vmem>>, vector<64x9xbf16>
    %3 = vector.extract_strided_slice %1 {offsets = [0, 0, 0], sizes = [1, 9, 64], strides = [1, 1, 1]} : vector<4x9x64xbf16> to vector<1x9x64xbf16>
    %4 = vector.shape_cast %3 : vector<1x9x64xbf16> to vector<9x64xbf16>
    %cst = arith.constant dense<0.000000e+00> : vector<64x64xf32>
    %5 = tpu.matmul %2, %4, %cst {dimension_numbers = #tpu.dot_dimension_numbers<[1], [0], [0], [1], [0, 0, 1, 1], [], []>} : vector<64x9xbf16>, vector<9x64xbf16>, vector<64x64xf32> -> vector<64x64xf32>
    %6 = vector.extract_strided_slice %1 {offsets = [1, 0, 0], sizes = [1, 9, 64], strides = [1, 1, 1]} : vector<4x9x64xbf16> to vector<1x9x64xbf16>
    %7 = vector.shape_cast %6 : vector<1x9x64xbf16> to vector<9x64xbf16>
    %cst_5 = arith.constant dense<0.000000e+00> : vector<64x64xf32>
    %8 = tpu.matmul %2, %7, %cst_5 {dimension_numbers = #tpu.dot_dimension_numbers<[1], [0], [0], [1], [0, 0, 1, 1], [], []>} : vector<64x9xbf16>, vector<9x64xbf16>, vector<64x64xf32> -> vector<64x64xf32>
    %9 = vector.extract_strided_slice %1 {offsets = [2, 0, 0], sizes = [1, 9, 64], strides = [1, 1, 1]} : vector<4x9x64xbf16> to vector<1x9x64xbf16>
    %10 = vector.shape_cast %9 : vector<1x9x64xbf16> to vector<9x64xbf16>
    %cst_6 = arith.constant dense<0.000000e+00> : vector<64x64xf32>
    %11 = tpu.matmul %2, %10, %cst_6 {dimension_numbers = #tpu.dot_dimension_numbers<[1], [0], [0], [1], [0, 0, 1, 1], [], []>} : vector<64x9xbf16>, vector<9x64xbf16>, vector<64x64xf32> -> vector<64x64xf32>
    %12 = vector.extract_strided_slice %1 {offsets = [3, 0, 0], sizes = [1, 9, 64], strides = [1, 1, 1]} : vector<4x9x64xbf16> to vector<1x9x64xbf16>
    %13 = vector.shape_cast %12 : vector<1x9x64xbf16> to vector<9x64xbf16>
    %cst_7 = arith.constant dense<0.000000e+00> : vector<64x64xf32>
    %14 = tpu.matmul %2, %13, %cst_7 {dimension_numbers = #tpu.dot_dimension_numbers<[1], [0], [0], [1], [0, 0, 1, 1], [], []>} : vector<64x9xbf16>, vector<9x64xbf16>, vector<64x64xf32> -> vector<64x64xf32>
    %15 = arith.maximumf %5, %8 : vector<64x64xf32>
    %16 = arith.maximumf %11, %14 : vector<64x64xf32>
    %17 = arith.maximumf %15, %16 : vector<64x64xf32>
    %c0_8 = arith.constant 0 : index
    %c0_9 = arith.constant 0 : index
    %18 = vector.load %arg4[%c0_8, %c0_9] : memref<64x1xf32, #tpu.memory_space<vmem>>, vector<64x1xf32>
    %19 = vector.broadcast %18 : vector<64x1xf32> to vector<64x64xf32>
    %20 = arith.addf %17, %19 : vector<64x64xf32>
    %cst_10 = arith.constant 0.000000e+00 : f32
    %21 = vector.broadcast %cst_10 : f32 to vector<64x64xf32>
    %22 = arith.maximumf %20, %21 : vector<64x64xf32>
    %c0_11 = arith.constant 0 : index
    %c0_12 = arith.constant 0 : index
    %23 = vector.load %arg5[%c0_11, %c0_12] : memref<8x64xbf16, #tpu.memory_space<vmem>>, vector<8x64xbf16>
    %24 = arith.truncf %22 : vector<64x64xf32> to vector<64x64xbf16>
    %cst_13 = arith.constant dense<0.000000e+00> : vector<8x64xf32>
    %25 = tpu.matmul %23, %24, %cst_13 {dimension_numbers = #tpu.dot_dimension_numbers<[1], [0], [0], [1], [0, 0, 1, 1], [], []>} : vector<8x64xbf16>, vector<64x64xbf16>, vector<8x64xf32> -> vector<8x64xf32>
    %c0_14 = arith.constant 0 : index
    %c0_15 = arith.constant 0 : index
    %26 = vector.load %arg6[%c0_14, %c0_15] : memref<8x1xf32, #tpu.memory_space<vmem>>, vector<8x1xf32>
    %27 = vector.broadcast %26 : vector<8x1xf32> to vector<8x64xf32>
    %28 = arith.addf %25, %27 : vector<8x64xf32>
    %29 = vector.extract_strided_slice %28 {offsets = [0, 0], sizes = [4, 64], strides = [1, 1]} : vector<8x64xf32> to vector<4x64xf32>
    %c0_16 = arith.constant 0 : index
    %c0_17 = arith.constant 0 : index
    %c0_18 = arith.constant 0 : index
    %30 = vector.load %arg7[%c0_16, %c0_17, %c0_18] : memref<1x4x64xf32, #tpu.memory_space<vmem>>, vector<1x4x64xf32>
    %31 = vector.shape_cast %30 : vector<1x4x64xf32> to vector<4x64xf32>
    %32 = vector.shape_cast %29 : vector<4x64xf32> to vector<1x4x64xf32>
    tpu.vector_store %arg7[%c0_16, %c0_17, %c0_18], %32 {strides = array<i32>} : memref<1x4x64xf32, #tpu.memory_space<vmem>>, vector<1x4x64xf32>,
    return
  }
  func.func @transform_0(%arg0: i32, %arg1: i32) -> (i32, i32, i32, i32) {
    %c0_i32 = arith.constant 0 : i32
    %c0_i32_0 = arith.constant 0 : i32
    %c0_i32_1 = arith.constant 0 : i32
    return %arg0, %c0_i32, %c0_i32_0, %arg1 : i32, i32, i32, i32
  }
  func.func @transform_1(%arg0: i32, %arg1: i32) -> (i32, i32) {
    %c0_i32 = arith.constant 0 : i32
    %c0_i32_0 = arith.constant 0 : i32
    %c0_i32_1 = arith.constant 0 : i32
    return %c0_i32, %c0_i32_0 : i32, i32
  }
  func.func @transform_2(%arg0: i32, %arg1: i32) -> (i32, i32) {
    %c0_i32 = arith.constant 0 : i32
    %c0_i32_0 = arith.constant 0 : i32
    %c0_i32_1 = arith.constant 0 : i32
    return %c0_i32, %c0_i32_0 : i32, i32
  }
  func.func @transform_3(%arg0: i32, %arg1: i32) -> (i32, i32) {
    %c0_i32 = arith.constant 0 : i32
    %c0_i32_0 = arith.constant 0 : i32
    %c0_i32_1 = arith.constant 0 : i32
    return %c0_i32, %c0_i32_0 : i32, i32
  }
  func.func @transform_4(%arg0: i32, %arg1: i32) -> (i32, i32) {
    %c0_i32 = arith.constant 0 : i32
    %c0_i32_0 = arith.constant 0 : i32
    %c0_i32_1 = arith.constant 0 : i32
    return %c0_i32, %c0_i32_0 : i32, i32
  }
  func.func @transform_5(%arg0: i32, %arg1: i32) -> (i32, i32, i32) {
    %c0_i32 = arith.constant 0 : i32
    %c0_i32_0 = arith.constant 0 : i32
    return %arg0, %c0_i32, %arg1 : i32, i32, i32
  }
}

</mosaic_0001>

<llo_original>
// kernel: tpu_custom_call.1
$region0: #{tpu_custom_call.1}
  #allocation0 [shape = 'u32[]', space=smem, size = 0x4, offset = 0x4, fixed_abs, tag = 'smem constant byte address 0x4 - core index']
  #allocation1 [shape = 'u32[72,128]{1,0:T(1,128)}', space=vmem, size = 0x9000, scoped, tag = 'internal scratch']
  %s0 = inlined_call_operand.vmem [shape: bf16[2,4,9,64], index: 0, kind: input, shape index: {}]
  %s1 = inlined_call_operand.vmem [shape: bf16[64,9], index: 1, kind: input, shape index: {}]
  %s2 = inlined_call_operand.vmem [shape: f32[64,1], index: 2, kind: input, shape index: {}]
  %s3 = inlined_call_operand.vmem [shape: bf16[8,64], index: 3, kind: input, shape index: {}]
  %s4 = inlined_call_operand.vmem [shape: f32[8,1], index: 4, kind: input, shape index: {}]
  %s5 = inlined_call_operand.hbm [shape: f32[2,4,64], index: 5, kind: output, shape index: {}]
  %s6 = sld [smem:[#allocation0]]
  $region53: #{tpu_custom_call.1} parent=0
    _
  %s8 = ssub.s32 1, %s6
  %s9 = scalar_select 0, %s8, %s6
  $region1: #{tpu_custom_call.1} parent=0
    #allocation2 [shape = 'u8[4096]{0}', space=vmem, size = 0x1000, scoped, tag = 'output window, operand 0']
    #allocation3 [shape = 's32[2]{0}', space=sflag, size = 0x8, scoped, tag = 'scoped memory for tpu_custom_call.1']
    %10 = vsyncpa [#allocation3], 0
    %s11 = scalar_lea.sflag [#allocation3], 1
    %12 = vsyncpa %s11, 0
    loop: start=0, step=1, limit=4
    $region2: #{tpu_custom_call.1} parent=1 // loop_pre_header
      _
    $region3: #{tpu_custom_call.1} parent=1 // loop_header
      %s14 = sphi 0, %s18
      %p15 = scmp.ge.s32.totalorder %s14, 4
      %s21 = sphi 0, %s33
      %s22 = sphi 0, %s29
      %s23 = sphi 0, %s21
      %s24 = sphi 0, %s22
      %s25 = sphi 0, %s23
      %s26 = sphi 0, %s24
      %s38 = sphi 0, %s40
      %s41 = sphi 0, %s38
      %s42 = sphi 0, %s41
      %s58 = sphi 0, %s42
      %s62 = sphi 0, %s62
      %s64 = sphi 0, %s62
      %s65 = sphi 0, %s64
      %s79 = sphi 0, %s65
      %s83 = sphi 0, %s83
      %s85 = sphi 0, %s83
      %s86 = sphi 0, %s85
      %s100 = sphi 0, %s86
      %s104 = sphi 0, %s104
      %s106 = sphi 0, %s104
      %s107 = sphi 0, %s106
      %s121 = sphi 0, %s107
      %s125 = sphi 0, %s125
      %s127 = sphi 0, %s125
      %s128 = sphi 0, %s127
      %s142 = sphi 0, %s128
      %s150 = sphi 0, %s152
      %s153 = sphi 0, %s150
      %s154 = sphi 0, %s153
      %s170 = sphi 0, %s154
    $region4: #{tpu_custom_call.1} parent=1 // loop_header_branch
      %17 = sbr.rel (%p15) target = $region8
    $region5: #{tpu_custom_call.1} parent=1 // loop_body
      %s19 = ssub.s32 %s14, 1
      %s20 = ssub.s32 %s14, 2
      %s27 = sadd.s32 1, %s22
      %p28 = scmp.ge.s32.totalorder %s27, 1
      %s29 = scalar_select %p28, 0, %s27
      %s30 = sadd.s32 1, %s21
      %s31 = scalar_select %p28, %s30, %s21
      %p32 = scmp.ge.s32.totalorder %s31, 2
      %s33 = scalar_select %p32, 0, %s31
      %s34 = ssub.s32 %s21, %s33
      %s35 = ssub.s32 %s22, %s29
      %s36 = sor.u32 %s34, %s35
      %p37 = scmp.eq.s32.totalorder %s36, 0
      %s39 = sadd.s32 %s38, 1
      %s40 = scalar_select %p37, %s38, %s39
      %p43 = pneg %p37
      %p44 = scmp.eq.s32.totalorder %s14, 1
      %p45 = por %p43, %p44
      %p46 = scmp.ne.s32.totalorder %s38, %s41
      %p47 = scmp.eq.s32.totalorder %s14, 0
      %p48 = por %p46, %p47
      %p49 = scmp.ne.s32.totalorder %s38, %s41
      %p50 = scmp.eq.s32.totalorder %s19, 1
      %p51 = por %p49, %p50
      %p52 = scmp.ne.s32.totalorder %s41, %s42
      %p53 = scmp.eq.s32.totalorder %s19, 0
      %p54 = por %p52, %p53
      %p55 = scmp.ne.s32.totalorder %s41, %s42
      %p56 = scmp.eq.s32.totalorder %s20, 1
      %p57 = por %p55, %p56
      %p59 = scmp.ne.s32.totalorder %s42, %s58
      %p60 = scmp.eq.s32.totalorder %s20, 0
      %p61 = por %p59, %p60
      %s63 = sadd.s32 %s62, 1
      %p66 = scmp.eq.s32.totalorder %s14, 1
      %p67 = scmp.ne.s32.totalorder %s62, %s64
      %p68 = scmp.eq.s32.totalorder %s14, 0
      %p69 = por %p67, %p68
      %p70 = scmp.ne.s32.totalorder %s62, %s64
      %p71 = scmp.eq.s32.totalorder %s19, 1
      %p72 = por %p70, %p71
      %p73 = scmp.ne.s32.totalorder %s64, %s65
      %p74 = scmp.eq.s32.totalorder %s19, 0
      %p75 = por %p73, %p74
      %p76 = scmp.ne.s32.totalorder %s64, %s65
      %p77 = scmp.eq.s32.totalorder %s20, 1
      %p78 = por %p76, %p77
      %p80 = scmp.ne.s32.totalorder %s65, %s79
      %p81 = scmp.eq.s32.totalorder %s20, 0
      %p82 = por %p80, %p81
      %s84 = sadd.s32 %s83, 1
      %p87 = scmp.eq.s32.totalorder %s14, 1
      %p88 = scmp.ne.s32.totalorder %s83, %s85
      %p89 = scmp.eq.s32.totalorder %s14, 0
      %p90 = por %p88, %p89
      %p91 = scmp.ne.s32.totalorder %s83, %s85
      %p92 = scmp.eq.s32.totalorder %s19, 1
      %p93 = por %p91, %p92
      %p94 = scmp.ne.s32.totalorder %s85, %s86
      %p95 = scmp.eq.s32.totalorder %s19, 0
      %p96 = por %p94, %p95
      %p97 = scmp.ne.s32.totalorder %s85, %s86
      %p98 = scmp.eq.s32.totalorder %s20, 1
      %p99 = por %p97, %p98
      %p101 = scmp.ne.s32.totalorder %s86, %s100
      %p102 = scmp.eq.s32.totalorder %s20, 0
      %p103 = por %p101, %p102
      %s105 = sadd.s32 %s104, 1
      %p108 = scmp.eq.s32.totalorder %s14, 1
      %p109 = scmp.ne.s32.totalorder %s104, %s106
      %p110 = scmp.eq.s32.totalorder %s14, 0
      %p111 = por %p109, %p110
      %p112 = scmp.ne.s32.totalorder %s104, %s106
      %p113 = scmp.eq.s32.totalorder %s19, 1
      %p114 = por %p112, %p113
      %p115 = scmp.ne.s32.totalorder %s106, %s107
      %p116 = scmp.eq.s32.totalorder %s19, 0
      %p117 = por %p115, %p116
      %p118 = scmp.ne.s32.totalorder %s106, %s107
      %p119 = scmp.eq.s32.totalorder %s20, 1
      %p120 = por %p118, %p119
      %p122 = scmp.ne.s32.totalorder %s107, %s121
      %p123 = scmp.eq.s32.totalorder %s20, 0
      %p124 = por %p122, %p123
      %s126 = sadd.s32 %s125, 1
      %p129 = scmp.eq.s32.totalorder %s14, 1
      %p130 = scmp.ne.s32.totalorder %s125, %s127
      %p131 = scmp.eq.s32.totalorder %s14, 0
      %p132 = por %p130, %p131
      %p133 = scmp.ne.s32.totalorder %s125, %s127
      %p134 = scmp.eq.s32.totalorder %s19, 1
      %p135 = por %p133, %p134
      %p136 = scmp.ne.s32.totalorder %s127, %s128
      %p137 = scmp.eq.s32.totalorder %s19, 0
      %p138 = por %p136, %p137
      %p139 = scmp.ne.s32.totalorder %s127, %s128
      %p140 = scmp.eq.s32.totalorder %s20, 1
      %p141 = por %p139, %p140
      %p143 = scmp.ne.s32.totalorder %s128, %s142
      %p144 = scmp.eq.s32.totalorder %s20, 0
      %p145 = por %p143, %p144
      %s146 = ssub.s32 %s21, %s33
      %s147 = ssub.s32 %s22, %s29
      %s148 = sor.u32 %s146, %s147
      %p149 = scmp.eq.s32.totalorder %s148, 0
      %s151 = sadd.s32 %s150, 1
      %s152 = scalar_select %p149, %s150, %s151
      %p155 = pneg %p149
      %p156 = scmp.eq.s32.totalorder %s14, 1
      %p157 = por %p155, %p156
      %p158 = scmp.ne.s32.totalorder %s150, %s153
      %p159 = scmp.eq.s32.totalorder %s14, 0
      %p160 = por %p158, %p159
      %p161 = scmp.ne.s32.totalorder %s150, %s153
      %p162 = scmp.eq.s32.totalorder %s19, 1
      %p163 = por %p161, %p162
      %p164 = scmp.ne.s32.totalorder %s153, %s154
      %p165 = scmp.eq.s32.totalorder %s19, 0
      %p166 = por %p164, %p165
      %p167 = scmp.ne.s32.totalorder %s153, %s154
      %p168 = scmp.eq.s32.totalorder %s20, 1
      %p169 = por %p167, %p168
      %p171 = scmp.ne.s32.totalorder %s154, %s170
      %p172 = scmp.eq.s32.totalorder %s20, 0
      %p173 = por %p171, %p172
      %p174 = scmp.le.s32.totalorder 1, %s14
      %p175 = scmp.lt.s32.totalorder %s14, 3
      %p176 = pnand %p174, %p175
      %p177 = pneg %p176
      // Predicated region
      $region9: #{tpu_custom_call.1} parent=5 // pred_check
        _
      $region10: #{tpu_custom_call.1} parent=5 // pred_check_branch
        %179 = sbr.rel (%p176) target = $region12
      $region11: #{tpu_custom_call.1} parent=5 // pred_region
        %s180 = ssub.s32 %s14, 1
        // Predicated region
        $region13: #{tpu_custom_call.1} parent=11 // pred_check
          %p181 = pneg %p75
        $region14: #{tpu_custom_call.1} parent=11 // pred_check_branch
          %183 = sbr.rel (%p181) target = $region16
        $region15: #{tpu_custom_call.1} parent=11 // pred_region
          _
        $region16: #{tpu_custom_call.1} parent=11 // pred_fallthru
          _
        // Predicated region
        $region17: #{tpu_custom_call.1} parent=11 // pred_check
          %p184 = pneg %p96
        $region18: #{tpu_custom_call.1} parent=11 // pred_check_branch
          %186 = sbr.rel (%p184) target = $region20
        $region19: #{tpu_custom_call.1} parent=11 // pred_region
          _
        $region20: #{tpu_custom_call.1} parent=11 // pred_fallthru
          _
        // Predicated region
        $region21: #{tpu_custom_call.1} parent=11 // pred_check
          %p187 = pneg %p117
        $region22: #{tpu_custom_call.1} parent=11 // pred_check_branch
          %189 = sbr.rel (%p187) target = $region24
        $region23: #{tpu_custom_call.1} parent=11 // pred_region
          _
        $region24: #{tpu_custom_call.1} parent=11 // pred_fallthru
          _
        // Predicated region
        $region25: #{tpu_custom_call.1} parent=11 // pred_check
          %p190 = pneg %p138
        $region26: #{tpu_custom_call.1} parent=11 // pred_check_branch
          %192 = sbr.rel (%p190) target = $region28
        $region27: #{tpu_custom_call.1} parent=11 // pred_region
          _
        $region28: #{tpu_custom_call.1} parent=11 // pred_fallthru
          _
      $region12: #{tpu_custom_call.1} parent=5 // pred_fallthru
        _
      %p193 = scmp.lt.s32.totalorder %s14, 2
      // Predicated region
      $region29: #{tpu_custom_call.1} parent=5 // pred_check
        %p194 = pneg %p193
      $region30: #{tpu_custom_call.1} parent=5 // pred_check_branch
        %196 = sbr.rel (%p194) target = $region32
      $region31: #{tpu_custom_call.1} parent=5 // pred_region
        // Predicated region
        $region33: #{tpu_custom_call.1} parent=31 // pred_check
          %p197 = pneg %p48
        $region34: #{tpu_custom_call.1} parent=31 // pred_check_branch
          %199 = sbr.rel (%p197) target = $region36
        $region35: #{tpu_custom_call.1} parent=31 // pred_region
          %p200 = scmp.lt.s32.totalorder %s21, 1
          %s201 = scalar_select %p200, %s21, 1
          %p202 = scmp.lt.s32.totalorder %s22, 0
          %s203 = scalar_select %p202, %s22, 0
          %s204 = smul.addr %s201, 8
          %s205 = sadd.s32 %s203, %s204
          %s206 = smul.addr %s205, 4
          %s207 = scalar_lea.vmem %s0, %s206
        $region36: #{tpu_custom_call.1} parent=31 // pred_fallthru
          _
      $region32: #{tpu_custom_call.1} parent=5 // pred_fallthru
        _
      %p208 = scmp.le.s32.totalorder 1, %s14
      %p209 = scmp.lt.s32.totalorder %s14, 3
      %p210 = pnand %p208, %p209
      %p211 = pneg %p210
      // Predicated region
      $region37: #{tpu_custom_call.1} parent=5 // pred_check
        _
      $region38: #{tpu_custom_call.1} parent=5 // pred_check_branch
        %213 = sbr.rel (%p210) target = $region40
      $region39: #{tpu_custom_call.1} parent=5 // pred_region
        %s214 = ssub.s32 %s14, 1
        %p215 = scmp.lt.s32.totalorder %s23, 1
        %s216 = scalar_select %p215, %s23, 1
        %p217 = scmp.lt.s32.totalorder %s24, 0
        %s218 = scalar_select %p217, %s24, 0
        %s219 = smul.addr %s216, 8
        %s220 = sadd.s32 %s218, %s219
        %s221 = smul.addr %s220, 4
        %s222 = scalar_lea.vmem %s0, %s221
        %p223 = pneg %p54
        %p224 = pneg %p51
        %p225 = pneg %p75
        %p226 = pneg %p72
        %p227 = pneg %p96
        %p228 = pneg %p93
        %p229 = pneg %p117
        %p230 = pneg %p114
        %p231 = pneg %p138
        %p232 = pneg %p135
        %p233 = pneg %p166
        %p234 = pneg %p163
        %s235 = sand.u32 %s153, 1
        %s236 = scalar_lea.sflag [#allocation3], %s235
        %s237 = sand.u32 %s153, 1
        %s238 = smul.addr %s237, 4
        %s239 = scalar_lea.vmem [#allocation2], %s238
        %p240 = scmp.lt.s32.totalorder %s23, 1
        %s241 = scalar_select %p240, %s23, 1
        %p242 = scmp.lt.s32.totalorder %s24, 0
        %s243 = scalar_select %p242, %s24, 0
        %s244 = smul.addr %s241, 8
        %s245 = sadd.s32 %s243, %s244
        %s246 = smul.addr %s245, 4
        %s247 = scalar_lea.vmem %s0, %s246
        %v249 = vld [vmem:[%s247] sm:$0xf]
        %v250 = vld [vmem:[%s247 + $0x4] sm:$0x1]
        %v251 = vld [vmem:[%s247 + $0x8] sm:$0xf]
        %v252 = vld [vmem:[%s247 + $0xc] sm:$0x1]
        %v253 = vld [vmem:[%s247 + $0x10] sm:$0xf]
        %v254 = vld [vmem:[%s247 + $0x14] sm:$0x1]
        %v255 = vld [vmem:[%s247 + $0x18] sm:$0xf]
        %v256 = vld [vmem:[%s247 + $0x1c] sm:$0x1]
        %v257 = vld [vmem:[%s1] sm:$0xf]
        %v258 = vld [vmem:[%s1 + $0x4] sm:$0xf]
        %v259 = vld [vmem:[%s1 + $0x8] sm:$0xf]
        %v260 = vld [vmem:[%s1 + $0xc] sm:$0xf]
        %v261 = vld [vmem:[%s1 + $0x10] sm:$0xf]
        %v262 = vld [vmem:[%s1 + $0x14] sm:$0xf]
        %v263 = vld [vmem:[%s1 + $0x18] sm:$0xf]
        %v264 = vld [vmem:[%s1 + $0x1c] sm:$0xf]
        %v273 = vunpack.c.l.b16 %v257
        %v274 = vunpack.c.l.b16 %v258
        %v275 = vunpack.c.l.b16 %v259
        %v276 = vunpack.c.l.b16 %v260
        %v277 = vunpack.c.l.b16 %v261
        %v278 = vunpack.c.l.b16 %v262
        %v279 = vunpack.c.l.b16 %v263
        %v280 = vunpack.c.l.b16 %v264
        %v281 = vpack.c.b16 %v274, %v273
        %v282 = vpack.c.b16 %v276, %v275
        %v283 = vpack.c.b16 %v278, %v277
        %v284 = vpack.c.b16 %v280, %v279
        %v287 = vunpack.c.l.b16 %v249
        %v288 = vunpack.c.l.b16 %v250
        %v289 = vpack.c.b16 %v288, %v287
        %vm290 = vcmask 72704
        %v292 = vsel %vm290, %v281, 0
        %v295 = vsel %vm290, %v282, 0
        %v298 = vsel %vm290, %v283, 0
        %v301 = vsel %vm290, %v284, 0
        %vm303 = vcmask 1043456
        %vm304 = vcmask 1044480
        %v305 = vsel %vm303, 4294967295, 65535
        %v306 = vsel %vm304, %v305, 0
        %v308 = vand.u32 %v289, %v306
        %310 = vmatpush.bf16.msra.mxu0 0
        %311 = vmatpush.bf16.msra.mxu0 0
        %312 = vmatpush.bf16.msra.mxu0 0
        %313 = vmatpush.bf16.msra.mxu0 0
        %314 = vmatpush.bf16.msra.mxu0 0
        %315 = vmatpush.bf16.msra.mxu0 0
        %316 = vmatpush.bf16.msra.mxu0 0
        %317 = vmatpush.bf16.msra.mxu0 %v308
        %318 = vmatmul.bf16.gmra.mxu0 %v292
        %v319 = vpop.f32.mrf.mxu0
        %v320 = vadd.f32 0.0, %v319
        %v321 = vpop.f32.mrf.mxu0
        %v322 = vadd.f32 0.0, %v321
        %323 = vmatmul.bf16.gmra.mxu0 %v295
        %v324 = vpop.f32.mrf.mxu0
        %v325 = vadd.f32 0.0, %v324
        %v326 = vpop.f32.mrf.mxu0
        %v327 = vadd.f32 0.0, %v326
        %328 = vmatmul.bf16.gmra.mxu0 %v298
        %v329 = vpop.f32.mrf.mxu0
        %v330 = vadd.f32 0.0, %v329
        %v331 = vpop.f32.mrf.mxu0
        %v332 = vadd.f32 0.0, %v331
        %333 = vmatmul.bf16.gmra.mxu0 %v301
        %v334 = vpop.f32.mrf.mxu0
        %v335 = vadd.f32 0.0, %v334
        %v336 = vpop.f32.mrf.mxu0
        %v337 = vadd.f32 0.0, %v336
        %338 = vdwg.mxu0
        %v341 = vunpack.c.l.b16 %v251
        %v342 = vunpack.c.l.b16 %v252
        %v343 = vpack.c.b16 %v342, %v341
        %v345 = vand.u32 %v343, %v306
        %347 = vmatpush.bf16.msra.mxu0 0
        %348 = vmatpush.bf16.msra.mxu0 0
        %349 = vmatpush.bf16.msra.mxu0 0
        %350 = vmatpush.bf16.msra.mxu0 0
        %351 = vmatpush.bf16.msra.mxu0 0
        %352 = vmatpush.bf16.msra.mxu0 0
        %353 = vmatpush.bf16.msra.mxu0 0
        %354 = vmatpush.bf16.msra.mxu0 %v345
        %355 = vmatmul.bf16.gmra.mxu0 %v292
        %v356 = vpop.f32.mrf.mxu0
        %v357 = vadd.f32 0.0, %v356
        %v358 = vpop.f32.mrf.mxu0
        %v359 = vadd.f32 0.0, %v358
        %360 = vmatmul.bf16.gmra.mxu0 %v295
        %v361 = vpop.f32.mrf.mxu0
        %v362 = vadd.f32 0.0, %v361
        %v363 = vpop.f32.mrf.mxu0
        %v364 = vadd.f32 0.0, %v363
        %365 = vmatmul.bf16.gmra.mxu0 %v298
        %v366 = vpop.f32.mrf.mxu0
        %v367 = vadd.f32 0.0, %v366
        %v368 = vpop.f32.mrf.mxu0
        %v369 = vadd.f32 0.0, %v368
        %370 = vmatmul.bf16.gmra.mxu0 %v301
        %v371 = vpop.f32.mrf.mxu0
        %v372 = vadd.f32 0.0, %v371
        %v373 = vpop.f32.mrf.mxu0
        %v374 = vadd.f32 0.0, %v373
        %375 = vdwg.mxu0
        %v378 = vunpack.c.l.b16 %v253
        %v379 = vunpack.c.l.b16 %v254
        %v380 = vpack.c.b16 %v379, %v378
        %v382 = vand.u32 %v380, %v306
        %384 = vmatpush.bf16.msra.mxu0 0
        %385 = vmatpush.bf16.msra.mxu0 0
        %386 = vmatpush.bf16.msra.mxu0 0
        %387 = vmatpush.bf16.msra.mxu0 0
        %388 = vmatpush.bf16.msra.mxu0 0
        %389 = vmatpush.bf16.msra.mxu0 0
        %390 = vmatpush.bf16.msra.mxu0 0
        %391 = vmatpush.bf16.msra.mxu0 %v382
        %392 = vmatmul.bf16.gmra.mxu0 %v292
        %v393 = vpop.f32.mrf.mxu0
        %v394 = vadd.f32 0.0, %v393
        %v395 = vpop.f32.mrf.mxu0
        %v396 = vadd.f32 0.0, %v395
        %397 = vmatmul.bf16.gmra.mxu0 %v295
        %v398 = vpop.f32.mrf.mxu0
        %v399 = vadd.f32 0.0, %v398
        %v400 = vpop.f32.mrf.mxu0
        %v401 = vadd.f32 0.0, %v400
        %402 = vmatmul.bf16.gmra.mxu0 %v298
        %v403 = vpop.f32.mrf.mxu0
        %v404 = vadd.f32 0.0, %v403
        %v405 = vpop.f32.mrf.mxu0
        %v406 = vadd.f32 0.0, %v405
        %407 = vmatmul.bf16.gmra.mxu0 %v301
        %v408 = vpop.f32.mrf.mxu0
        %v409 = vadd.f32 0.0, %v408
        %v410 = vpop.f32.mrf.mxu0
        %v411 = vadd.f32 0.0, %v410
        %412 = vdwg.mxu0
        %v415 = vunpack.c.l.b16 %v255
        %v416 = vunpack.c.l.b16 %v256
        %v417 = vpack.c.b16 %v416, %v415
        %v419 = vand.u32 %v417, %v306
        %421 = vmatpush.bf16.msra.mxu0 0
        %422 = vmatpush.bf16.msra.mxu0 0
        %423 = vmatpush.bf16.msra.mxu0 0
        %424 = vmatpush.bf16.msra.mxu0 0
        %425 = vmatpush.bf16.msra.mxu0 0
        %426 = vmatpush.bf16.msra.mxu0 0
        %427 = vmatpush.bf16.msra.mxu0 0
        %428 = vmatpush.bf16.msra.mxu0 %v419
        %429 = vmatmul.bf16.gmra.mxu0 %v292
        %v430 = vpop.f32.mrf.mxu0
        %v431 = vadd.f32 0.0, %v430
        %v432 = vpop.f32.mrf.mxu0
        %v433 = vadd.f32 0.0, %v432
        %434 = vmatmul.bf16.gmra.mxu0 %v295
        %v435 = vpop.f32.mrf.mxu0
        %v436 = vadd.f32 0.0, %v435
        %v437 = vpop.f32.mrf.mxu0
        %v438 = vadd.f32 0.0, %v437
        %439 = vmatmul.bf16.gmra.mxu0 %v298
        %v440 = vpop.f32.mrf.mxu0
        %v441 = vadd.f32 0.0, %v440
        %v442 = vpop.f32.mrf.mxu0
        %v443 = vadd.f32 0.0, %v442
        %444 = vmatmul.bf16.gmra.mxu0 %v301
        %v445 = vpop.f32.mrf.mxu0
        %v446 = vadd.f32 0.0, %v445
        %v447 = vpop.f32.mrf.mxu0
        %v448 = vadd.f32 0.0, %v447
        %449 = vdwg.mxu0
        %v450 = vmax.f32 %v320, %v357
        %v451 = vmax.f32 %v322, %v359
        %v452 = vmax.f32 %v325, %v362
        %v453 = vmax.f32 %v327, %v364
        %v454 = vmax.f32 %v330, %v367
        %v455 = vmax.f32 %v332, %v369
        %v456 = vmax.f32 %v335, %v372
        %v457 = vmax.f32 %v337, %v374
        %v458 = vmax.f32 %v394, %v431
        %v459 = vmax.f32 %v396, %v433
        %v460 = vmax.f32 %v399, %v436
        %v461 = vmax.f32 %v401, %v438
        %v462 = vmax.f32 %v404, %v441
        %v463 = vmax.f32 %v406, %v443
        %v464 = vmax.f32 %v409, %v446
        %v465 = vmax.f32 %v411, %v448
        %v466 = vmax.f32 %v450, %v458
        %v467 = vmax.f32 %v451, %v459
        %v468 = vmax.f32 %v452, %v460
        %v469 = vmax.f32 %v453, %v461
        %v470 = vmax.f32 %v454, %v462
        %v471 = vmax.f32 %v455, %v463
        %v472 = vmax.f32 %v456, %v464
        %v473 = vmax.f32 %v457, %v465
        %v474 = vld [vmem:[%s2] sm:$0xff]
        %v475 = vld [vmem:[%s2 + $0x8] sm:$0xff]
        %v476 = vld [vmem:[%s2 + $0x10] sm:$0xff]
        %v477 = vld [vmem:[%s2 + $0x18] sm:$0xff]
        %v478 = vld [vmem:[%s2 + $0x20] sm:$0xff]
        %v479 = vld [vmem:[%s2 + $0x28] sm:$0xff]
        %v480 = vld [vmem:[%s2 + $0x30] sm:$0xff]
        %v481 = vld [vmem:[%s2 + $0x38] sm:$0xff]
        %483 = vset.pattern.permute.xlu0 0
        %484 = vperm.xlu0 %483, %v474
        %v485 = vpop.permute.xlu0 %484
        %488 = vset.pattern.permute.xlu0 0
        %489 = vperm.xlu0 %488, %v475
        %v490 = vpop.permute.xlu0 %489
        %493 = vset.pattern.permute.xlu0 0
        %494 = vperm.xlu0 %493, %v476
        %v495 = vpop.permute.xlu0 %494
        %498 = vset.pattern.permute.xlu0 0
        %499 = vperm.xlu0 %498, %v477
        %v500 = vpop.permute.xlu0 %499
        %503 = vset.pattern.permute.xlu0 0
        %504 = vperm.xlu0 %503, %v478
        %v505 = vpop.permute.xlu0 %504
        %508 = vset.pattern.permute.xlu0 0
        %509 = vperm.xlu0 %508, %v479
        %v510 = vpop.permute.xlu0 %509
        %513 = vset.pattern.permute.xlu0 0
        %514 = vperm.xlu0 %513, %v480
        %v515 = vpop.permute.xlu0 %514
        %518 = vset.pattern.permute.xlu0 0
        %519 = vperm.xlu0 %518, %v481
        %v520 = vpop.permute.xlu0 %519
        %v522 = vadd.f32 %v466, %v485
        %v523 = vadd.f32 %v467, %v490
        %v524 = vadd.f32 %v468, %v495
        %v525 = vadd.f32 %v469, %v500
        %v526 = vadd.f32 %v470, %v505
        %v527 = vadd.f32 %v471, %v510
        %v528 = vadd.f32 %v472, %v515
        %v529 = vadd.f32 %v473, %v520
        %v530 = vmax.f32 %v522, 0.0
        %v531 = vmax.f32 %v523, 0.0
        %v532 = vmax.f32 %v524, 0.0
        %v533 = vmax.f32 %v525, 0.0
        %v534 = vmax.f32 %v526, 0.0
        %v535 = vmax.f32 %v527, 0.0
        %v536 = vmax.f32 %v528, 0.0
        %v537 = vmax.f32 %v529, 0.0
        %v538 = vld [vmem:[%s3] sm:$0xf]
        %v539 = vpack.c.bf16 %v531, %v530
        %v540 = vpack.c.bf16 %v533, %v532
        %v541 = vpack.c.bf16 %v535, %v534
        %v542 = vpack.c.bf16 %v537, %v536
        %v543 = vld [vmem:[%s4] sm:$0xff]
        %545 = vset.pattern.permute.xlu0 0
        %546 = vperm.xlu0 %545, %v543
        %v547 = vpop.permute.xlu0 %546
        %vm549 = vcmask 523264
        %v551 = vsel %vm549, %v538, 0
        %553 = vmatpush.bf16.msra.mxu0 0
        %554 = vmatpush.bf16.msra.mxu0 0
        %555 = vmatpush.bf16.msra.mxu0 0
        %556 = vmatpush.bf16.msra.mxu0 0
        %557 = vmatpush.bf16.msra.mxu0 %v542
        %558 = vmatpush.bf16.msra.mxu0 %v541
        %559 = vmatpush.bf16.msra.mxu0 %v540
        %560 = vmatpush.bf16.msra.mxu0 %v539
        %561 = vmatmul.bf16.gmra.mxu0 %v551
        %v562 = vpop.f32.mrf.mxu0
        %v563 = vadd.f32 %v547, %v562
        %v564 = vpop.f32.mrf.mxu0
        %565 = vdwg.mxu0
        %vm566 = vcmask 519168
        %567 = vst.msk [vmem:[%s239] sm:$0xf] %vm566, %v563
        %s568 = sand.u32 %s153, 1
        %s569 = scalar_lea.sflag [#allocation3], %s568
        %s570 = sand.u32 %s153, 1
        %s571 = smul.addr %s570, 4
        %s572 = scalar_lea.vmem [#allocation2], %s571
        // Predicated region
        $region41: #{tpu_custom_call.1} parent=39 // pred_check
          %p573 = pneg %p163
        $region42: #{tpu_custom_call.1} parent=39 // pred_check_branch
          %575 = sbr.rel (%p573) target = $region44
        $region43: #{tpu_custom_call.1} parent=39 // pred_region
          %577 = vsyncadd %s569, 0
          %s578 = sadd.s32 %s24, %s23
          %s579 = smul.addr %s578, 4
          %s580 = scalar_lea.hbm %s5, %s579
          %s582 = sshll.u32 %s572, 4
          %s583 = int_to_ptr.vmem [resolvable:$true] %s582
          %s584 = sshll.u32 %s580, 4
          %s585 = int_to_ptr.hbm [resolvable:$true] %s584
          %587 = dma.vmem_to_hbm [thread:$0]  %s583, 64, %s585, %s569
        $region44: #{tpu_custom_call.1} parent=39 // pred_fallthru
          _
      $region40: #{tpu_custom_call.1} parent=5 // pred_fallthru
        _
      %p588 = scmp.le.s32.totalorder 2, %s14
      // Predicated region
      $region45: #{tpu_custom_call.1} parent=5 // pred_check
        %p589 = pneg %p588
      $region46: #{tpu_custom_call.1} parent=5 // pred_check_branch
        %591 = sbr.rel (%p589) target = $region48
      $region47: #{tpu_custom_call.1} parent=5 // pred_region
        %s592 = ssub.s32 %s14, 2
        // Predicated region
        $region49: #{tpu_custom_call.1} parent=47 // pred_check
          %p593 = pneg %p169
        $region50: #{tpu_custom_call.1} parent=47 // pred_check_branch
          %595 = sbr.rel (%p593) target = $region52
        $region51: #{tpu_custom_call.1} parent=47 // pred_region
          %s596 = sand.u32 %s154, 1
          %s597 = scalar_lea.sflag [#allocation3], %s596
          %s598 = sand.u32 %s154, 1
          %s599 = smul.addr %s598, 4
          %s600 = scalar_lea.vmem [#allocation2], %s599
          %602 = dma.done %s597, 64
        $region52: #{tpu_custom_call.1} parent=47 // pred_fallthru
          _
      $region48: #{tpu_custom_call.1} parent=5 // pred_fallthru
        _
    $region6: #{tpu_custom_call.1} parent=1 // loop_footer
      %s18 = sadd.s32 1, %s14
    $region7: #{tpu_custom_call.1} parent=1 // loop_footer_branch
      %13 = sbr.rel target = $region3
    $region8: #{tpu_custom_call.1} parent=1 // loop_exit
      _
    %603 = vsyncpa [#allocation3], 1
    %s604 = scalar_lea.sflag [#allocation3], 1
    %605 = vsyncpa %s604, 1

</llo_original>
